<compile_context>
chip_gen: v5e
topology: v5e:2x2
jax: 0.10.0
libtpu: 0.0.40
codegen_flags: <defaults>
</compile_context>

<pallas_src>
import math
import jax
import jax.numpy as jnp
from jax.experimental import pallas as pl
from jax.experimental.pallas import tpu as pltpu


def _round_up(x, m):
    return ((x + m - 1) // m) * m


def _mlp_reward_kernel(s_ref, a_ref, w1s_ref, w1a_ref, b1_ref, w2_ref, b2_ref,
                       o_ref):
    tb = s_ref.shape[0]            # TILE_B (static block size)
    adim = w1a_ref.shape[0]        # action_dim (static)

    s = s_ref[...]                 # (tb, Ds) f32
    a = a_ref[...]                 # (tb, 1)  i32

    # Fused one-hot via iota compare (VPU); avoids host-side one_hot/concat and
    # the extra HBM round trip for a materialized x.
    iota = jax.lax.broadcasted_iota(jnp.int32, (tb, adim), 1)
    onehot = (iota == a).astype(jnp.float32)                    # (tb, A)

    # Layer 1 (split weights): [s, onehot] @ W1 == s @ W1_s + onehot @ W1_a
    h = jnp.dot(s, w1s_ref[...], preferred_element_type=jnp.float32)
    h = h + jnp.dot(onehot, w1a_ref[...], preferred_element_type=jnp.float32)
    h = jnp.maximum(h + b1_ref[...], 0.0)                       # (tb, H) ReLU

    # Layer 2 (out_features = 1): VPU multiply + lane reduction instead of a
    # skinny N=1 MXU matmul.
    r = jnp.sum(h * w2_ref[...], axis=-1)                       # (tb,)
    r = r + b2_ref[0, 0]                                        # scalar from SMEM

    # Lane-dense store: (1, tb) block, tb a multiple of 128 -> unmasked vst.
    o_ref[...] = r.reshape(1, tb).astype(o_ref.dtype)


def reward_mlp_forward(s, a_idx, w1_s, w1_a, b1, w2_row, b2, *, tile_b=2048):
    """s: (B, Ds) f32; a_idx: (B,) int; weights pre-transposed (in, out).

    w1_s: (Ds, H), w1_a: (A, H), b1: (1, H), w2_row: (1, H), b2: (1, 1).
    Returns rewards of shape (B,).
    """
    B, Ds = s.shape
    A, H = w1_a.shape

    # Tile size: multiple of 128 (lane-dense output), capped at tile_b, shrunk
    # for small batches so we don't over-pad.
    tb = min(tile_b, _round_up(max(B, 1), 128))
    Bp = _round_up(B, tb)
    if Bp != B:
        # Pad the tail tile (pad rows use action index 0 — valid — and are
        # sliced off below; avoids un-bounds-checked reads of stale VMEM).
        s = jnp.pad(s, ((0, Bp - B), (0, 0)))
        a_idx = jnp.pad(a_idx, ((0, Bp - B),))

    s = s.astype(jnp.float32)
    a2 = a_idx.astype(jnp.int32).reshape(Bp, 1)

    out = pl.pallas_call(
        _mlp_reward_kernel,
        out_shape=jax.ShapeDtypeStruct((1, Bp), jnp.float32),
        grid=(Bp // tb,),
        in_specs=[
            pl.BlockSpec((tb, Ds), lambda i: (i, 0)),            # s tile
            pl.BlockSpec((tb, 1), lambda i: (i, 0)),             # action idx tile
            pl.BlockSpec((Ds, H), lambda i: (0, 0)),             # W1_s (resident)
            pl.BlockSpec((A, H), lambda i: (0, 0)),              # W1_a (resident)
            pl.BlockSpec((1, H), lambda i: (0, 0)),              # b1   (resident)
            pl.BlockSpec((1, H), lambda i: (0, 0)),              # w2 row (resident)
            pl.BlockSpec(memory_space=pltpu.MemorySpace.SMEM),   # b2 scalar
        ],
        out_specs=pl.BlockSpec((1, tb), lambda i: (0, i)),       # lane-dense slab
        compiler_params=pltpu.CompilerParams(
            dimension_semantics=("parallel",)),                  # v7x: both TCs
    )(s, a2, w1_s, w1_a, b1, w2_row, b2)

    return out.reshape(Bp)[:B]


def neural_network_reward_model_forward(s, a, params, action_type="discrete"):
    """Mirrors NeuralNetworkRewardModel.forward for layer_sizes=[Ds+A, H, 1]."""
    # TODO(synk): only the discrete-action path (module default in this demo) is
    # wired to the fused one-hot kernel; continuous actions would feed a float
    # action block into the same split-weight matmul.
    assert action_type == "discrete"
    r = reward_mlp_forward(s.astype(jnp.float32), a,
                           params["w1_s"], params["w1_a"], params["b1"],
                           params["w2"], params["b2"])
    return jnp.squeeze(r)   # matches torch .squeeze()


def init_params(key, state_dim, action_dim, hidden):
    """Deterministic init mimicking torch.nn.Linear (uniform +-1/sqrt(fan_in)).

    W1 is stored pre-transposed and split into its state / action column blocks.
    """
    d_in = state_dim + action_dim
    k1, k2, k3, k4 = jax.random.split(key, 4)
    lim1 = 1.0 / math.sqrt(d_in)
    lim2 = 1.0 / math.sqrt(hidden)
    w1 = jax.random.uniform(k1, (d_in, hidden), jnp.float32, -lim1, lim1)
    b1 = jax.random.uniform(k2, (1, hidden), jnp.float32, -lim1, lim1)
    w2 = jax.random.uniform(k3, (hidden, 1), jnp.float32, -lim2, lim2)
    b2 = jax.random.uniform(k4, (1, 1), jnp.float32, -lim2, lim2)
    return {
        "w1_s": w1[:state_dim, :],           # (Ds, H)
        "w1_a": w1[state_dim:, :],           # (A, H)
        "b1": b1,                            # (1, H)
        "w2": w2.reshape(1, hidden),         # (1, H) row for VPU mul+reduce
        "b2": b2,                            # (1, 1) scalar (SMEM)
    }


if __name__ == "__main__":
    # Small shapes consistent with the module: layer_sizes = [state_dim+action_dim, 32, 1]
    batch = 8
    state_dim = 4
    action_dim = 4
    hidden = 32

    key = jax.random.PRNGKey(0)
    k_s, k_a, k_p = jax.random.split(key, 3)

    s = jax.random.normal(k_s, (batch, state_dim), dtype=jnp.float32)
    a = jax.random.randint(k_a, (batch,), 0, action_dim, dtype=jnp.int32)
    params = init_params(k_p, state_dim, action_dim, hidden)

    r = neural_network_reward_model_forward(s, a, params, action_type="discrete")
    r = jax.block_until_ready(r)

    # Pure-JAX reference check (same math, no Pallas)
    a_oh = jax.nn.one_hot(a, action_dim, dtype=jnp.float32)
    x = jnp.concatenate([s, a_oh], axis=1)
    w1_full = jnp.concatenate([params["w1_s"], params["w1_a"]], axis=0)
    h_ref = jnp.maximum(x @ w1_full + params["b1"], 0.0)
    r_ref = jnp.squeeze(h_ref @ params["w2"].T + params["b2"])
    assert r.shape == (batch,)
    assert jnp.allclose(r, r_ref, atol=1e-5), "mismatch vs JAX reference"

    print("KERNEL_OK")
</pallas_src>

<mosaic_0001>
module attributes {stable_mosaic.version = 11 : i64} {
  func.func @_mlp_reward_kernel(%arg0: i32, %arg1: memref<128x4xf32, #tpu.memory_space<vmem>>, %arg2: memref<128x1xi32, #tpu.memory_space<vmem>>, %arg3: memref<4x32xf32, #tpu.memory_space<vmem>>, %arg4: memref<4x32xf32, #tpu.memory_space<vmem>>, %arg5: memref<1x32xf32, #tpu.memory_space<vmem>>, %arg6: memref<1x32xf32, #tpu.memory_space<vmem>>, %arg7: memref<1x1xf32, #tpu.memory_space<smem>>, %arg8: memref<1x128xf32, #tpu.memory_space<vmem>>) attributes {dimension_semantics = [#tpu.dimension_semantics<parallel>], iteration_bounds = array<i64: 1>, scalar_prefetch = 0 : i64, scratch_operands = 0 : i64, tpu.core_type = #tpu.core_type<tc>, window_params = [{transform_indices = @transform_0, window_bounds = array<i64: 128, 4>}, {transform_indices = @transform_1, window_bounds = array<i64: 128, 1>}, {pipeline_mode = #tpu.pipeline_mode<synchronous>, transform_indices = @transform_2, window_bounds = array<i64: 4, 32>}, {pipeline_mode = #tpu.pipeline_mode<synchronous>, transform_indices = @transform_3, window_bounds = array<i64: 4, 32>}, {pipeline_mode = #tpu.pipeline_mode<synchronous>, transform_indices = @transform_4, window_bounds = array<i64: 1, 32>}, {pipeline_mode = #tpu.pipeline_mode<synchronous>, transform_indices = @transform_5, window_bounds = array<i64: 1, 32>}, {transform_indices = @transform_6, window_bounds = array<i64: 1, 1>}, {transform_indices = @transform_7, window_bounds = array<i64: 1, 128>}]} {
    %c0 = arith.constant 0 : index
    %c0_0 = arith.constant 0 : index
    %0 = vector.load %arg1[%c0, %c0_0] : memref<128x4xf32, #tpu.memory_space<vmem>>, vector<128x4xf32>
    %c0_1 = arith.constant 0 : index
    %c0_2 = arith.constant 0 : index
    %1 = vector.load %arg2[%c0_1, %c0_2] : memref<128x1xi32, #tpu.memory_space<vmem>>, vector<128x1xi32>
    %2 = tpu.iota {dimensions = array<i32: 1>} : vector<128x4xi32>
    %3 = vector.broadcast %1 : vector<128x1xi32> to vector<128x4xi32>
    %4 = arith.cmpi eq, %2, %3 : vector<128x4xi32>
    %5 = arith.extui %4 : vector<128x4xi1> to vector<128x4xi32>
    %6 = arith.sitofp %5 : vector<128x4xi32> to vector<128x4xf32>
    %c0_3 = arith.constant 0 : index
    %c0_4 = arith.constant 0 : index
    %7 = vector.load %arg3[%c0_3, %c0_4] : memref<4x32xf32, #tpu.memory_space<vmem>>, vector<4x32xf32>
    %cst = arith.constant dense<0.000000e+00> : vector<128x32xf32>
    %8 = tpu.matmul %0, %7, %cst {dimension_numbers = #tpu.dot_dimension_numbers<[1], [0], [0], [1], [0, 0, 1, 1], [], []>} : vector<128x4xf32>, vector<4x32xf32>, vector<128x32xf32> -> vector<128x32xf32>
    %c0_5 = arith.constant 0 : index
    %c0_6 = arith.constant 0 : index
    %9 = vector.load %arg4[%c0_5, %c0_6] : memref<4x32xf32, #tpu.memory_space<vmem>>, vector<4x32xf32>
    %cst_7 = arith.constant dense<0.000000e+00> : vector<128x32xf32>
    %10 = tpu.matmul %6, %9, %cst_7 {dimension_numbers = #tpu.dot_dimension_numbers<[1], [0], [0], [1], [0, 0, 1, 1], [], []>} : vector<128x4xf32>, vector<4x32xf32>, vector<128x32xf32> -> vector<128x32xf32>
    %11 = arith.addf %8, %10 : vector<128x32xf32>
    %c0_8 = arith.constant 0 : index
    %c0_9 = arith.constant 0 : index
    %12 = vector.load %arg5[%c0_8, %c0_9] : memref<1x32xf32, #tpu.memory_space<vmem>>, vector<1x32xf32>
    %13 = vector.broadcast %12 : vector<1x32xf32> to vector<128x32xf32>
    %14 = arith.addf %11, %13 : vector<128x32xf32>
    %cst_10 = arith.constant 0.000000e+00 : f32
    %15 = vector.broadcast %cst_10 : f32 to vector<128x32xf32>
    %16 = arith.maximumf %14, %15 : vector<128x32xf32>
    %c0_11 = arith.constant 0 : index
    %c0_12 = arith.constant 0 : index
    %17 = vector.load %arg6[%c0_11, %c0_12] : memref<1x32xf32, #tpu.memory_space<vmem>>, vector<1x32xf32>
    %18 = vector.broadcast %17 : vector<1x32xf32> to vector<128x32xf32>
    %19 = arith.mulf %16, %18 : vector<128x32xf32>
    %cst_13 = arith.constant dense<0.000000e+00> : vector<128xf32>
    %20 = vector.multi_reduction <add>, %19, %cst_13 [1] : vector<128x32xf32> to vector<128xf32>
    %c0_14 = arith.constant 0 : index
    %c0_15 = arith.constant 0 : index
    %21 = memref.load %arg7[%c0_14, %c0_15] : memref<1x1xf32, #tpu.memory_space<smem>>
    %22 = vector.broadcast %21 : f32 to vector<128xf32>
    %23 = arith.addf %20, %22 : vector<128xf32>
    %24 = vector.shape_cast %23 : vector<128xf32> to vector<1x128xf32>
    %c0_16 = arith.constant 0 : index
    %c0_17 = arith.constant 0 : index
    %25 = vector.load %arg8[%c0_16, %c0_17] : memref<1x128xf32, #tpu.memory_space<vmem>>, vector<1x128xf32>
    tpu.vector_store %arg8[%c0_16, %c0_17], %24 {strides = array<i32>} : memref<1x128xf32, #tpu.memory_space<vmem>>, vector<1x128xf32>,
    return
  }
  func.func @transform_0(%arg0: i32) -> (i32, i32) {
    %c0_i32 = arith.constant 0 : i32
    %c0_i32_0 = arith.constant 0 : i32
    return %arg0, %c0_i32 : i32, i32
  }
  func.func @transform_1(%arg0: i32) -> (i32, i32) {
    %c0_i32 = arith.constant 0 : i32
    %c0_i32_0 = arith.constant 0 : i32
    return %arg0, %c0_i32 : i32, i32
  }
  func.func @transform_2(%arg0: i32) -> (i32, i32) {
    %c0_i32 = arith.constant 0 : i32
    %c0_i32_0 = arith.constant 0 : i32
    %c0_i32_1 = arith.constant 0 : i32
    return %c0_i32, %c0_i32_0 : i32, i32
  }
  func.func @transform_3(%arg0: i32) -> (i32, i32) {
    %c0_i32 = arith.constant 0 : i32
    %c0_i32_0 = arith.constant 0 : i32
    %c0_i32_1 = arith.constant 0 : i32
    return %c0_i32, %c0_i32_0 : i32, i32
  }
  func.func @transform_4(%arg0: i32) -> (i32, i32) {
    %c0_i32 = arith.constant 0 : i32
    %c0_i32_0 = arith.constant 0 : i32
    %c0_i32_1 = arith.constant 0 : i32
    return %c0_i32, %c0_i32_0 : i32, i32
  }
  func.func @transform_5(%arg0: i32) -> (i32, i32) {
    %c0_i32 = arith.constant 0 : i32
    %c0_i32_0 = arith.constant 0 : i32
    %c0_i32_1 = arith.constant 0 : i32
    return %c0_i32, %c0_i32_0 : i32, i32
  }
  func.func @transform_6(%arg0: i32) -> (i32, i32) {
    %c0_i32 = arith.constant 0 : i32
    %c0_i32_0 = arith.constant 0 : i32
    %c0_i32_1 = arith.constant 0 : i32
    return %c0_i32, %c0_i32_0 : i32, i32
  }
  func.func @transform_7(%arg0: i32) -> (i32, i32) {
    %c0_i32 = arith.constant 0 : i32
    %c0_i32_0 = arith.constant 0 : i32
    return %c0_i32, %arg0 : i32, i32
  }
}

</mosaic_0001>

<llo_original>
// kernel: tpu_custom_call.1
$region0: #{tpu_custom_call.1}
  #allocation0 [shape = 'u32[]', space=smem, size = 0x4, offset = 0x4, fixed_abs, tag = 'smem constant byte address 0x4 - core index']
  #allocation1 [shape = 'u32[72,128]{1,0:T(1,128)}', space=vmem, size = 0x9000, scoped, tag = 'internal scratch']
  #allocation2 [shape = 'f32[1,1]{1,0:T(1,128)S(6)}', space=smem, size = 0x200, scoped, tag = 'scoped memory for tpu_custom_call.1']
  %s0 = inlined_call_operand.vmem [shape: f32[128,4], index: 0, kind: input, shape index: {}]
  %s1 = inlined_call_operand.vmem [shape: s32[128,1], index: 1, kind: input, shape index: {}]
  %s2 = inlined_call_operand.vmem [shape: f32[4,32], index: 2, kind: input, shape index: {}]
  %s3 = inlined_call_operand.vmem [shape: f32[4,32], index: 3, kind: input, shape index: {}]
  %s4 = inlined_call_operand.vmem [shape: f32[1,32], index: 4, kind: input, shape index: {}]
  %s5 = inlined_call_operand.vmem [shape: f32[1,32], index: 5, kind: input, shape index: {}]
  %s6 = inlined_call_operand.<no memory space> [shape: f32[1,1], index: 6, kind: input, shape index: {}]
  %s7 = inlined_call_operand.hbm [shape: f32[1,128], index: 7, kind: output, shape index: {}]
  %s8 = sld [smem:[#allocation0]]
  $region38: #{tpu_custom_call.1} parent=0
    _
  %s10 = ssub.s32 1, %s8
  %s11 = scalar_select 0, %s10, %s8
  %12 = sst [smem:[#allocation2]] %s6
  $region1: #{tpu_custom_call.1} parent=0
    #allocation3 [shape = 'u8[512]{0}', space=vmem, size = 0x400, scoped, tag = 'output window, operand 0, single buffered']
    #allocation4 [shape = 's32[1]{0}', space=sflag, size = 0x4, scoped, tag = 'scoped memory for tpu_custom_call.1']
    %13 = vsyncpa [#allocation4], 0
    // Predicated region
    $region2: #{tpu_custom_call.1} parent=1 // pred_check
      _
    $region3: #{tpu_custom_call.1} parent=1 // pred_check_branch
      %15 = sbr.rel (0) target = $region5
    $region4: #{tpu_custom_call.1} parent=1 // pred_region
      _
    $region5: #{tpu_custom_call.1} parent=1 // pred_fallthru
      _
    // Predicated region
    $region6: #{tpu_custom_call.1} parent=1 // pred_check
      _
    $region7: #{tpu_custom_call.1} parent=1 // pred_check_branch
      %17 = sbr.rel (0) target = $region9
    $region8: #{tpu_custom_call.1} parent=1 // pred_region
      _
    $region9: #{tpu_custom_call.1} parent=1 // pred_fallthru
      _
    // Predicated region
    $region10: #{tpu_custom_call.1} parent=1 // pred_check
      _
    $region11: #{tpu_custom_call.1} parent=1 // pred_check_branch
      %19 = sbr.rel (0) target = $region13
    $region12: #{tpu_custom_call.1} parent=1 // pred_region
      _
    $region13: #{tpu_custom_call.1} parent=1 // pred_fallthru
      _
    // Predicated region
    $region14: #{tpu_custom_call.1} parent=1 // pred_check
      _
    $region15: #{tpu_custom_call.1} parent=1 // pred_check_branch
      %21 = sbr.rel (0) target = $region17
    $region16: #{tpu_custom_call.1} parent=1 // pred_region
      _
    $region17: #{tpu_custom_call.1} parent=1 // pred_fallthru
      _
    // Predicated region
    $region18: #{tpu_custom_call.1} parent=1 // pred_check
      _
    $region19: #{tpu_custom_call.1} parent=1 // pred_check_branch
      %23 = sbr.rel (0) target = $region21
    $region20: #{tpu_custom_call.1} parent=1 // pred_region
      _
    $region21: #{tpu_custom_call.1} parent=1 // pred_fallthru
      _
    // Predicated region
    $region22: #{tpu_custom_call.1} parent=1 // pred_check
      _
    $region23: #{tpu_custom_call.1} parent=1 // pred_check_branch
      %25 = sbr.rel (0) target = $region25
    $region24: #{tpu_custom_call.1} parent=1 // pred_region
      _
    $region25: #{tpu_custom_call.1} parent=1 // pred_fallthru
      _
    // Predicated region
    $region26: #{tpu_custom_call.1} parent=1 // pred_check
      _
    $region27: #{tpu_custom_call.1} parent=1 // pred_check_branch
      %27 = sbr.rel (0) target = $region29
    $region28: #{tpu_custom_call.1} parent=1 // pred_region
      _
    $region29: #{tpu_custom_call.1} parent=1 // pred_fallthru
      _
    %v28 = vld [vmem:[%s0] sm:$0xff]
    %v29 = vld [vmem:[%s0 + $0x8] sm:$0xff]
    %v30 = vld [vmem:[%s0 + $0x10] sm:$0xff]
    %v31 = vld [vmem:[%s0 + $0x18] sm:$0xff]
    %v32 = vld [vmem:[%s0 + $0x20] sm:$0xff]
    %v33 = vld [vmem:[%s0 + $0x28] sm:$0xff]
    %v34 = vld [vmem:[%s0 + $0x30] sm:$0xff]
    %v35 = vld [vmem:[%s0 + $0x38] sm:$0xff]
    %v36 = vld [vmem:[%s0 + $0x40] sm:$0xff]
    %v37 = vld [vmem:[%s0 + $0x48] sm:$0xff]
    %v38 = vld [vmem:[%s0 + $0x50] sm:$0xff]
    %v39 = vld [vmem:[%s0 + $0x58] sm:$0xff]
    %v40 = vld [vmem:[%s0 + $0x60] sm:$0xff]
    %v41 = vld [vmem:[%s0 + $0x68] sm:$0xff]
    %v42 = vld [vmem:[%s0 + $0x70] sm:$0xff]
    %v43 = vld [vmem:[%s0 + $0x78] sm:$0xff]
    %v44 = vld [vmem:[%s1] sm:$0xff]
    %v45 = vld [vmem:[%s1 + $0x8] sm:$0xff]
    %v46 = vld [vmem:[%s1 + $0x10] sm:$0xff]
    %v47 = vld [vmem:[%s1 + $0x18] sm:$0xff]
    %v48 = vld [vmem:[%s1 + $0x20] sm:$0xff]
    %v49 = vld [vmem:[%s1 + $0x28] sm:$0xff]
    %v50 = vld [vmem:[%s1 + $0x30] sm:$0xff]
    %v51 = vld [vmem:[%s1 + $0x38] sm:$0xff]
    %v52 = vld [vmem:[%s1 + $0x40] sm:$0xff]
    %v53 = vld [vmem:[%s1 + $0x48] sm:$0xff]
    %v54 = vld [vmem:[%s1 + $0x50] sm:$0xff]
    %v55 = vld [vmem:[%s1 + $0x58] sm:$0xff]
    %v56 = vld [vmem:[%s1 + $0x60] sm:$0xff]
    %v57 = vld [vmem:[%s1 + $0x68] sm:$0xff]
    %v58 = vld [vmem:[%s1 + $0x70] sm:$0xff]
    %v59 = vld [vmem:[%s1 + $0x78] sm:$0xff]
    %v60 = vlaneseq
    %v61 = vand.u32 %v60, 127
    %62 = vset.pattern.permute.xlu0 0
    %63 = vperm.xlu0 %62, %v44
    %v64 = vpop.permute.xlu0 %63
    %65 = vset.pattern.permute.xlu0 0
    %66 = vperm.xlu0 %65, %v45
    %v67 = vpop.permute.xlu0 %66
    %68 = vset.pattern.permute.xlu0 0
    %69 = vperm.xlu0 %68, %v46
    %v70 = vpop.permute.xlu0 %69
    %71 = vset.pattern.permute.xlu0 0
    %72 = vperm.xlu0 %71, %v47
    %v73 = vpop.permute.xlu0 %72
    %74 = vset.pattern.permute.xlu0 0
    %75 = vperm.xlu0 %74, %v48
    %v76 = vpop.permute.xlu0 %75
    %77 = vset.pattern.permute.xlu0 0
    %78 = vperm.xlu0 %77, %v49
    %v79 = vpop.permute.xlu0 %78
    %80 = vset.pattern.permute.xlu0 0
    %81 = vperm.xlu0 %80, %v50
    %v82 = vpop.permute.xlu0 %81
    %83 = vset.pattern.permute.xlu0 0
    %84 = vperm.xlu0 %83, %v51
    %v85 = vpop.permute.xlu0 %84
    %86 = vset.pattern.permute.xlu0 0
    %87 = vperm.xlu0 %86, %v52
    %v88 = vpop.permute.xlu0 %87
    %89 = vset.pattern.permute.xlu0 0
    %90 = vperm.xlu0 %89, %v53
    %v91 = vpop.permute.xlu0 %90
    %92 = vset.pattern.permute.xlu0 0
    %93 = vperm.xlu0 %92, %v54
    %v94 = vpop.permute.xlu0 %93
    %95 = vset.pattern.permute.xlu0 0
    %96 = vperm.xlu0 %95, %v55
    %v97 = vpop.permute.xlu0 %96
    %98 = vset.pattern.permute.xlu0 0
    %99 = vperm.xlu0 %98, %v56
    %v100 = vpop.permute.xlu0 %99
    %101 = vset.pattern.permute.xlu0 0
    %102 = vperm.xlu0 %101, %v57
    %v103 = vpop.permute.xlu0 %102
    %104 = vset.pattern.permute.xlu0 0
    %105 = vperm.xlu0 %104, %v58
    %v106 = vpop.permute.xlu0 %105
    %107 = vset.pattern.permute.xlu0 0
    %108 = vperm.xlu0 %107, %v59
    %v109 = vpop.permute.xlu0 %108
    %vm110 = vcmp.eq.s32.totalorder %v61, %v64
    %vm111 = vcmp.eq.s32.totalorder %v61, %v67
    %vm112 = vcmp.eq.s32.totalorder %v61, %v70
    %vm113 = vcmp.eq.s32.totalorder %v61, %v73
    %vm114 = vcmp.eq.s32.totalorder %v61, %v76
    %vm115 = vcmp.eq.s32.totalorder %v61, %v79
    %vm116 = vcmp.eq.s32.totalorder %v61, %v82
    %vm117 = vcmp.eq.s32.totalorder %v61, %v85
    %vm118 = vcmp.eq.s32.totalorder %v61, %v88
    %vm119 = vcmp.eq.s32.totalorder %v61, %v91
    %vm120 = vcmp.eq.s32.totalorder %v61, %v94
    %vm121 = vcmp.eq.s32.totalorder %v61, %v97
    %vm122 = vcmp.eq.s32.totalorder %v61, %v100
    %vm123 = vcmp.eq.s32.totalorder %v61, %v103
    %vm124 = vcmp.eq.s32.totalorder %v61, %v106
    %vm125 = vcmp.eq.s32.totalorder %v61, %v109
    %v126 = vsel %vm110, 1, 0
    %v127 = vsel %vm111, 1, 0
    %v128 = vsel %vm112, 1, 0
    %v129 = vsel %vm113, 1, 0
    %v130 = vsel %vm114, 1, 0
    %v131 = vsel %vm115, 1, 0
    %v132 = vsel %vm116, 1, 0
    %v133 = vsel %vm117, 1, 0
    %v134 = vsel %vm118, 1, 0
    %v135 = vsel %vm119, 1, 0
    %v136 = vsel %vm120, 1, 0
    %v137 = vsel %vm121, 1, 0
    %v138 = vsel %vm122, 1, 0
    %v139 = vsel %vm123, 1, 0
    %v140 = vsel %vm124, 1, 0
    %v141 = vsel %vm125, 1, 0
    %v142 = vcvt.s32.f32 %v126
    %v143 = vcvt.s32.f32 %v127
    %v144 = vcvt.s32.f32 %v128
    %v145 = vcvt.s32.f32 %v129
    %v146 = vcvt.s32.f32 %v130
    %v147 = vcvt.s32.f32 %v131
    %v148 = vcvt.s32.f32 %v132
    %v149 = vcvt.s32.f32 %v133
    %v150 = vcvt.s32.f32 %v134
    %v151 = vcvt.s32.f32 %v135
    %v152 = vcvt.s32.f32 %v136
    %v153 = vcvt.s32.f32 %v137
    %v154 = vcvt.s32.f32 %v138
    %v155 = vcvt.s32.f32 %v139
    %v156 = vcvt.s32.f32 %v140
    %v157 = vcvt.s32.f32 %v141
    %v158 = vld [vmem:[%s2] sm:$0xf]
    %v159 = vld [vmem:[%s3] sm:$0xf]
    %vm160 = vcmask 31744
    %v162 = vsel %vm160, %v142, 0
    %v165 = vsel %vm160, %v143, 0
    %v168 = vsel %vm160, %v144, 0
    %v171 = vsel %vm160, %v145, 0
    %v174 = vsel %vm160, %v146, 0
    %v177 = vsel %vm160, %v147, 0
    %v180 = vsel %vm160, %v148, 0
    %v183 = vsel %vm160, %v149, 0
    %v186 = vsel %vm160, %v150, 0
    %v189 = vsel %vm160, %v151, 0
    %v192 = vsel %vm160, %v152, 0
    %v195 = vsel %vm160, %v153, 0
    %v198 = vsel %vm160, %v154, 0
    %v201 = vsel %vm160, %v155, 0
    %v204 = vsel %vm160, %v156, 0
    %v207 = vsel %vm160, %v157, 0
    %vm209 = vcmask 1043456
    %v211 = vsel %vm209, %v159, 0
    %213 = vmatpush.msra.mxu0 0.0
    %214 = vmatpush.msra.mxu0 0.0
    %215 = vmatpush.msra.mxu0 0.0
    %216 = vmatpush.msra.mxu0 0.0
    %217 = vmatpush.msra.mxu0 0.0
    %218 = vmatpush.msra.mxu0 0.0
    %219 = vmatpush.msra.mxu0 0.0
    %220 = vmatpush.msra.mxu0 0.0
    %221 = vmatpush.msra.mxu0 0.0
    %222 = vmatpush.msra.mxu0 0.0
    %223 = vmatpush.msra.mxu0 0.0
    %224 = vmatpush.msra.mxu0 0.0
    %225 = vmatpush.msra.mxu0 0.0
    %226 = vmatpush.msra.mxu0 0.0
    %227 = vmatpush.msra.mxu0 0.0
    %228 = vmatpush.msra.mxu0 %v211
    %229 = vmatmul.f32.gmra.mxu0 %v162
    %v230 = vpop.f32.mrf.mxu0
    %v231 = vadd.f32 0.0, %v230
    %232 = vmatmul.f32.gmra.mxu0 %v165
    %v233 = vpop.f32.mrf.mxu0
    %v234 = vadd.f32 0.0, %v233
    %235 = vmatmul.f32.gmra.mxu0 %v168
    %v236 = vpop.f32.mrf.mxu0
    %v237 = vadd.f32 0.0, %v236
    %238 = vmatmul.f32.gmra.mxu0 %v171
    %v239 = vpop.f32.mrf.mxu0
    %v240 = vadd.f32 0.0, %v239
    %241 = vmatmul.f32.gmra.mxu0 %v174
    %v242 = vpop.f32.mrf.mxu0
    %v243 = vadd.f32 0.0, %v242
    %244 = vmatmul.f32.gmra.mxu0 %v177
    %v245 = vpop.f32.mrf.mxu0
    %v246 = vadd.f32 0.0, %v245
    %247 = vmatmul.f32.gmra.mxu0 %v180
    %v248 = vpop.f32.mrf.mxu0
    %v249 = vadd.f32 0.0, %v248
    %250 = vmatmul.f32.gmra.mxu0 %v183
    %v251 = vpop.f32.mrf.mxu0
    %v252 = vadd.f32 0.0, %v251
    %253 = vmatmul.f32.gmra.mxu0 %v186
    %v254 = vpop.f32.mrf.mxu0
    %v255 = vadd.f32 0.0, %v254
    %256 = vmatmul.f32.gmra.mxu0 %v189
    %v257 = vpop.f32.mrf.mxu0
    %v258 = vadd.f32 0.0, %v257
    %259 = vmatmul.f32.gmra.mxu0 %v192
    %v260 = vpop.f32.mrf.mxu0
    %v261 = vadd.f32 0.0, %v260
    %262 = vmatmul.f32.gmra.mxu0 %v195
    %v263 = vpop.f32.mrf.mxu0
    %v264 = vadd.f32 0.0, %v263
    %265 = vmatmul.f32.gmra.mxu0 %v198
    %v266 = vpop.f32.mrf.mxu0
    %v267 = vadd.f32 0.0, %v266
    %268 = vmatmul.f32.gmra.mxu0 %v201
    %v269 = vpop.f32.mrf.mxu0
    %v270 = vadd.f32 0.0, %v269
    %271 = vmatmul.f32.gmra.mxu0 %v204
    %v272 = vpop.f32.mrf.mxu0
    %v273 = vadd.f32 0.0, %v272
    %274 = vmatmul.f32.gmra.mxu0 %v207
    %v275 = vpop.f32.mrf.mxu0
    %v276 = vadd.f32 0.0, %v275
    %277 = vdwg.mxu0
    %v279 = vsel %vm160, %v28, 0
    %v282 = vsel %vm160, %v29, 0
    %v285 = vsel %vm160, %v30, 0
    %v288 = vsel %vm160, %v31, 0
    %v291 = vsel %vm160, %v32, 0
    %v294 = vsel %vm160, %v33, 0
    %v297 = vsel %vm160, %v34, 0
    %v300 = vsel %vm160, %v35, 0
    %v303 = vsel %vm160, %v36, 0
    %v306 = vsel %vm160, %v37, 0
    %v309 = vsel %vm160, %v38, 0
    %v312 = vsel %vm160, %v39, 0
    %v315 = vsel %vm160, %v40, 0
    %v318 = vsel %vm160, %v41, 0
    %v321 = vsel %vm160, %v42, 0
    %v324 = vsel %vm160, %v43, 0
    %v327 = vsel %vm209, %v158, 0
    %329 = vmatpush.msra.mxu0 0.0
    %330 = vmatpush.msra.mxu0 0.0
    %331 = vmatpush.msra.mxu0 0.0
    %332 = vmatpush.msra.mxu0 0.0
    %333 = vmatpush.msra.mxu0 0.0
    %334 = vmatpush.msra.mxu0 0.0
    %335 = vmatpush.msra.mxu0 0.0
    %336 = vmatpush.msra.mxu0 0.0
    %337 = vmatpush.msra.mxu0 0.0
    %338 = vmatpush.msra.mxu0 0.0
    %339 = vmatpush.msra.mxu0 0.0
    %340 = vmatpush.msra.mxu0 0.0
    %341 = vmatpush.msra.mxu0 0.0
    %342 = vmatpush.msra.mxu0 0.0
    %343 = vmatpush.msra.mxu0 0.0
    %344 = vmatpush.msra.mxu0 %v327
    %345 = vmatmul.f32.gmra.mxu0 %v279
    %v346 = vpop.f32.mrf.mxu0
    %v347 = vadd.f32 %v231, %v346
    %348 = vmatmul.f32.gmra.mxu0 %v282
    %v349 = vpop.f32.mrf.mxu0
    %v350 = vadd.f32 %v234, %v349
    %351 = vmatmul.f32.gmra.mxu0 %v285
    %v352 = vpop.f32.mrf.mxu0
    %v353 = vadd.f32 %v237, %v352
    %354 = vmatmul.f32.gmra.mxu0 %v288
    %v355 = vpop.f32.mrf.mxu0
    %v356 = vadd.f32 %v240, %v355
    %357 = vmatmul.f32.gmra.mxu0 %v291
    %v358 = vpop.f32.mrf.mxu0
    %v359 = vadd.f32 %v243, %v358
    %360 = vmatmul.f32.gmra.mxu0 %v294
    %v361 = vpop.f32.mrf.mxu0
    %v362 = vadd.f32 %v246, %v361
    %363 = vmatmul.f32.gmra.mxu0 %v297
    %v364 = vpop.f32.mrf.mxu0
    %v365 = vadd.f32 %v249, %v364
    %366 = vmatmul.f32.gmra.mxu0 %v300
    %v367 = vpop.f32.mrf.mxu0
    %v368 = vadd.f32 %v252, %v367
    %369 = vmatmul.f32.gmra.mxu0 %v303
    %v370 = vpop.f32.mrf.mxu0
    %v371 = vadd.f32 %v255, %v370
    %372 = vmatmul.f32.gmra.mxu0 %v306
    %v373 = vpop.f32.mrf.mxu0
    %v374 = vadd.f32 %v258, %v373
    %375 = vmatmul.f32.gmra.mxu0 %v309
    %v376 = vpop.f32.mrf.mxu0
    %v377 = vadd.f32 %v261, %v376
    %378 = vmatmul.f32.gmra.mxu0 %v312
    %v379 = vpop.f32.mrf.mxu0
    %v380 = vadd.f32 %v264, %v379
    %381 = vmatmul.f32.gmra.mxu0 %v315
    %v382 = vpop.f32.mrf.mxu0
    %v383 = vadd.f32 %v267, %v382
    %384 = vmatmul.f32.gmra.mxu0 %v318
    %v385 = vpop.f32.mrf.mxu0
    %v386 = vadd.f32 %v270, %v385
    %387 = vmatmul.f32.gmra.mxu0 %v321
    %v388 = vpop.f32.mrf.mxu0
    %v389 = vadd.f32 %v273, %v388
    %390 = vmatmul.f32.gmra.mxu0 %v324
    %v391 = vpop.f32.mrf.mxu0
    %v392 = vadd.f32 %v276, %v391
    %393 = vdwg.mxu0
    %v394 = vld [vmem:[%s4] sm:$0x1]
    %v396 = vperm.slane %v394, 0
    %v398 = vadd.f32 %v347, %v396
    %v399 = vadd.f32 %v350, %v396
    %v400 = vadd.f32 %v353, %v396
    %v401 = vadd.f32 %v356, %v396
    %v402 = vadd.f32 %v359, %v396
    %v403 = vadd.f32 %v362, %v396
    %v404 = vadd.f32 %v365, %v396
    %v405 = vadd.f32 %v368, %v396
    %v406 = vadd.f32 %v371, %v396
    %v407 = vadd.f32 %v374, %v396
    %v408 = vadd.f32 %v377, %v396
    %v409 = vadd.f32 %v380, %v396
    %v410 = vadd.f32 %v383, %v396
    %v411 = vadd.f32 %v386, %v396
    %v412 = vadd.f32 %v389, %v396
    %v413 = vadd.f32 %v392, %v396
    %v414 = vmax.f32 %v398, 0.0
    %v415 = vmax.f32 %v399, 0.0
    %v416 = vmax.f32 %v400, 0.0
    %v417 = vmax.f32 %v401, 0.0
    %v418 = vmax.f32 %v402, 0.0
    %v419 = vmax.f32 %v403, 0.0
    %v420 = vmax.f32 %v404, 0.0
    %v421 = vmax.f32 %v405, 0.0
    %v422 = vmax.f32 %v406, 0.0
    %v423 = vmax.f32 %v407, 0.0
    %v424 = vmax.f32 %v408, 0.0
    %v425 = vmax.f32 %v409, 0.0
    %v426 = vmax.f32 %v410, 0.0
    %v427 = vmax.f32 %v411, 0.0
    %v428 = vmax.f32 %v412, 0.0
    %v429 = vmax.f32 %v413, 0.0
    %v430 = vld [vmem:[%s5] sm:$0x1]
    %v432 = vperm.slane %v430, 0
    %v434 = vmul.f32 %v414, %v432
    %v435 = vmul.f32 %v415, %v432
    %v436 = vmul.f32 %v416, %v432
    %v437 = vmul.f32 %v417, %v432
    %v438 = vmul.f32 %v418, %v432
    %v439 = vmul.f32 %v419, %v432
    %v440 = vmul.f32 %v420, %v432
    %v441 = vmul.f32 %v421, %v432
    %v442 = vmul.f32 %v422, %v432
    %v443 = vmul.f32 %v423, %v432
    %v444 = vmul.f32 %v424, %v432
    %v445 = vmul.f32 %v425, %v432
    %v446 = vmul.f32 %v426, %v432
    %v447 = vmul.f32 %v427, %v432
    %v448 = vmul.f32 %v428, %v432
    %v449 = vmul.f32 %v429, %v432
    %vm450 = vcmask 261120
    %v451 = vsel %vm450, %v434, 0.0
    %452 = vadd.xlane.f32.xlu0 %v451
    %v453 = vpop.xlane.xlu0 %452
    %v454 = vsel %vm450, %v435, 0.0
    %455 = vadd.xlane.f32.xlu0 %v454
    %v456 = vpop.xlane.xlu0 %455
    %v457 = vsel %vm450, %v436, 0.0
    %458 = vadd.xlane.f32.xlu0 %v457
    %v459 = vpop.xlane.xlu0 %458
    %v460 = vsel %vm450, %v437, 0.0
    %461 = vadd.xlane.f32.xlu0 %v460
    %v462 = vpop.xlane.xlu0 %461
    %v463 = vsel %vm450, %v438, 0.0
    %464 = vadd.xlane.f32.xlu0 %v463
    %v465 = vpop.xlane.xlu0 %464
    %v466 = vsel %vm450, %v439, 0.0
    %467 = vadd.xlane.f32.xlu0 %v466
    %v468 = vpop.xlane.xlu0 %467
    %v469 = vsel %vm450, %v440, 0.0
    %470 = vadd.xlane.f32.xlu0 %v469
    %v471 = vpop.xlane.xlu0 %470
    %v472 = vsel %vm450, %v441, 0.0
    %473 = vadd.xlane.f32.xlu0 %v472
    %v474 = vpop.xlane.xlu0 %473
    %v475 = vsel %vm450, %v442, 0.0
    %476 = vadd.xlane.f32.xlu0 %v475
    %v477 = vpop.xlane.xlu0 %476
    %v478 = vsel %vm450, %v443, 0.0
    %479 = vadd.xlane.f32.xlu0 %v478
    %v480 = vpop.xlane.xlu0 %479
    %v481 = vsel %vm450, %v444, 0.0
    %482 = vadd.xlane.f32.xlu0 %v481
    %v483 = vpop.xlane.xlu0 %482
    %v484 = vsel %vm450, %v445, 0.0
    %485 = vadd.xlane.f32.xlu0 %v484
    %v486 = vpop.xlane.xlu0 %485
    %v487 = vsel %vm450, %v446, 0.0
    %488 = vadd.xlane.f32.xlu0 %v487
    %v489 = vpop.xlane.xlu0 %488
    %v490 = vsel %vm450, %v447, 0.0
    %491 = vadd.xlane.f32.xlu0 %v490
    %v492 = vpop.xlane.xlu0 %491
    %v493 = vsel %vm450, %v448, 0.0
    %494 = vadd.xlane.f32.xlu0 %v493
    %v495 = vpop.xlane.xlu0 %494
    %v496 = vsel %vm450, %v449, 0.0
    %497 = vadd.xlane.f32.xlu0 %v496
    %v498 = vpop.xlane.xlu0 %497
    %s499 = sld [smem:[#allocation2]]
    %v500 = vstv %s499
    %v501 = vadd.f32 %v453, %v500
    %v502 = vadd.f32 %v456, %v500
    %v503 = vadd.f32 %v459, %v500
    %v504 = vadd.f32 %v462, %v500
    %v505 = vadd.f32 %v465, %v500
    %v506 = vadd.f32 %v468, %v500
    %v507 = vadd.f32 %v471, %v500
    %v508 = vadd.f32 %v474, %v500
    %v509 = vadd.f32 %v477, %v500
    %v510 = vadd.f32 %v480, %v500
    %v511 = vadd.f32 %v483, %v500
    %v512 = vadd.f32 %v486, %v500
    %v513 = vadd.f32 %v489, %v500
    %v514 = vadd.f32 %v492, %v500
    %v515 = vadd.f32 %v495, %v500
    %v516 = vadd.f32 %v498, %v500
    %v533 = vperm.slane %v501, %v61
    %v534 = vadd.s32 %v61, 4294967288
    %v535 = vperm.slane %v502, %v534
    %vm536 = vcmask 130112
    %v537 = vsel %vm536, %v535, %v533
    %v538 = vadd.s32 %v61, 4294967280
    %v539 = vperm.slane %v503, %v538
    %vm540 = vcmask 195712
    %v541 = vsel %vm540, %v539, %v537
    %v542 = vadd.s32 %v61, 4294967272
    %v543 = vperm.slane %v504, %v542
    %vm544 = vcmask 261312
    %v545 = vsel %vm544, %v543, %v541
    %v546 = vadd.s32 %v61, 4294967264
    %v547 = vperm.slane %v505, %v546
    %vm548 = vcmask 326912
    %v549 = vsel %vm548, %v547, %v545
    %v550 = vadd.s32 %v61, 4294967256
    %v551 = vperm.slane %v506, %v550
    %vm552 = vcmask 392512
    %v553 = vsel %vm552, %v551, %v549
    %v554 = vadd.s32 %v61, 4294967248
    %v555 = vperm.slane %v507, %v554
    %vm556 = vcmask 458112
    %v557 = vsel %vm556, %v555, %v553
    %v558 = vadd.s32 %v61, 4294967240
    %v559 = vperm.slane %v508, %v558
    %vm560 = vcmask 523712
    %v561 = vsel %vm560, %v559, %v557
    %v562 = vadd.s32 %v61, 4294967232
    %v563 = vperm.slane %v509, %v562
    %vm564 = vcmask 589312
    %v565 = vsel %vm564, %v563, %v561
    %v566 = vadd.s32 %v61, 4294967224
    %v567 = vperm.slane %v510, %v566
    %vm568 = vcmask 654912
    %v569 = vsel %vm568, %v567, %v565
    %v570 = vadd.s32 %v61, 4294967216
    %v571 = vperm.slane %v511, %v570
    %vm572 = vcmask 720512
    %v573 = vsel %vm572, %v571, %v569
    %v574 = vadd.s32 %v61, 4294967208
    %v575 = vperm.slane %v512, %v574
    %vm576 = vcmask 786112
    %v577 = vsel %vm576, %v575, %v573
    %v578 = vadd.s32 %v61, 4294967200
    %v579 = vperm.slane %v513, %v578
    %vm580 = vcmask 851712
    %v581 = vsel %vm580, %v579, %v577
    %v582 = vadd.s32 %v61, 4294967192
    %v583 = vperm.slane %v514, %v582
    %vm584 = vcmask 917312
    %v585 = vsel %vm584, %v583, %v581
    %v586 = vadd.s32 %v61, 4294967184
    %v587 = vperm.slane %v515, %v586
    %vm588 = vcmask 982912
    %v589 = vsel %vm588, %v587, %v585
    %v590 = vadd.s32 %v61, 4294967176
    %v591 = vperm.slane %v516, %v590
    %vm592 = vcmask 1048512
    %v593 = vsel %vm592, %v591, %v589
    %595 = vst [vmem:[#allocation3] sm:$0x1] %v593
    // Predicated region
    $region30: #{tpu_custom_call.1} parent=1 // pred_check
      _
    $region31: #{tpu_custom_call.1} parent=1 // pred_check_branch
      %597 = sbr.rel (0) target = $region33
    $region32: #{tpu_custom_call.1} parent=1 // pred_region
      %599 = vsyncadd [#allocation4], 0
      %s601 = sshll.u32 [#allocation3], 4
      %s602 = int_to_ptr.vmem [resolvable:$true] %s601
      %s603 = sshll.u32 %s7, 4
      %s604 = int_to_ptr.hbm [resolvable:$true] %s603
      %606 = dma.vmem_to_hbm [thread:$0]  %s602, 16, %s604, [#allocation4]
    $region33: #{tpu_custom_call.1} parent=1 // pred_fallthru
      _
    // Predicated region
    $region34: #{tpu_custom_call.1} parent=1 // pred_check
      _
    $region35: #{tpu_custom_call.1} parent=1 // pred_check_branch
      %608 = sbr.rel (0) target = $region37
    $region36: #{tpu_custom_call.1} parent=1 // pred_region
      %610 = dma.done [#allocation4], 16
    $region37: #{tpu_custom_call.1} parent=1 // pred_fallthru
      _
    %611 = vsyncpa [#allocation4], 1

</llo_original>
